<compile_context>
chip_gen: v5e
topology: v5e:2x2
jax: 0.10.0
libtpu: 0.0.40
codegen_flags: <defaults>
</compile_context>

<pallas_src>
import math

import jax
import jax.numpy as jnp
from jax.experimental import pallas as pl
from jax.experimental.pallas import tpu as pltpu


def _gcn_body(x_ref, wbd_ref, att_ref, att_first):
    # x_ref:   (N, B*F_in)        bf16, node-major, batch folded into lanes
    # wbd_ref: (B*F_in, B*F_out)  bf16, block-diagonal weight
    # att_ref: (N, N)             bf16
    x = x_ref[...]
    wbd = wbd_ref[...]
    att = att_ref[...]
    if att_first:
        # (att @ x) @ Wbd  -- fewer MACs when F_in < F_out.
        tmp = jnp.dot(att, x, preferred_element_type=jnp.float32)
        out = jnp.dot(tmp.astype(jnp.bfloat16), wbd,
                      preferred_element_type=jnp.float32)
    else:
        # att @ (x @ Wbd) -- fewer MACs when F_in >= F_out.
        support = jnp.dot(x, wbd, preferred_element_type=jnp.float32)
        out = jnp.dot(att, support.astype(jnp.bfloat16),
                      preferred_element_type=jnp.float32)
    return out  # (N, B*F_out) f32


def _make_gcn_kernel(att_first, has_bias):
    if has_bias:
        def kernel(x_ref, wbd_ref, att_ref, bias_ref, o_ref):
            out = _gcn_body(x_ref, wbd_ref, att_ref, att_first)
            o_ref[...] = (out + bias_ref[...]).astype(o_ref.dtype)
    else:
        def kernel(x_ref, wbd_ref, att_ref, o_ref):
            out = _gcn_body(x_ref, wbd_ref, att_ref, att_first)
            o_ref[...] = out.astype(o_ref.dtype)
    return kernel


def prepare_params(weight, att, bias, B):
    """Build the bf16 / block-diagonal / tiled params ONCE (amortized across calls).

    weight: (F_in, F_out) f32 -> (B*F_in, B*F_out) bf16 block-diagonal
    att:    (N, N) f32        -> bf16
    bias:   (F_out,) f32 or None -> (1, B*F_out) f32 (tiled per batch) or None
    """
    F_in, F_out = weight.shape
    wbd = jnp.kron(jnp.eye(B, dtype=weight.dtype), weight).astype(jnp.bfloat16)
    att_b = att.astype(jnp.bfloat16)
    bias_t = None
    if bias is not None:
        bias_t = jnp.tile(bias.reshape(1, F_out), (1, B)).astype(jnp.float32)
    return wbd, att_b, bias_t


def gcn_lane_dense(x_nd, wbd, att_b, bias_t=None, *, out_dtype=jnp.float32):
    """Lane-dense GCN layer: (N, B*F_in) bf16 -> (N, B*F_out).

    Chain this directly for stacks of GCN layers to avoid the boundary
    transposes entirely (layout stays lane-dense end-to-end).
    """
    N, BF_in = x_nd.shape
    BF_out = wbd.shape[1]
    att_first = BF_in < BF_out
    has_bias = bias_t is not None

    in_specs = [
        pl.BlockSpec((N, BF_in), lambda i: (0, 0)),
        pl.BlockSpec((BF_in, BF_out), lambda i: (0, 0)),
        pl.BlockSpec((N, N), lambda i: (0, 0)),
    ]
    args = (x_nd, wbd, att_b)
    if has_bias:
        in_specs.append(pl.BlockSpec((1, BF_out), lambda i: (0, 0)))
        args = args + (bias_t,)

    return pl.pallas_call(
        _make_gcn_kernel(att_first, has_bias),
        out_shape=jax.ShapeDtypeStruct((N, BF_out), out_dtype),
        grid_spec=pltpu.PrefetchScalarGridSpec(
            num_scalar_prefetch=0,
            grid=(1,),  # whole forward in one grid step (latency-bound size)
            in_specs=in_specs,
            out_specs=pl.BlockSpec((N, BF_out), lambda i: (0, 0)),
        ),
        compiler_params=pltpu.CompilerParams(
            dimension_semantics=("arbitrary",)),
    )(*args)


@jax.jit
def graph_convolution(x, weight, att, bias=None):
    """Convenience wrapper matching PyTorch semantics.

    x: (B, N, F_in) f32; weight: (F_in, F_out); att: (N, N); bias: (F_out,) or None.
    Returns (B, N, F_out) f32.
    """
    B, N, F_in = x.shape
    F_out = weight.shape[1]

    wbd, att_b, bias_t = prepare_params(weight, att, bias, B)

    # Lane-dense, node-major layout: x_nd[n, b*F_in + i] = x[b, n, i].
    # (Choose B so that B*F_in / B*F_out are multiples of 128 when possible.)
    x_nd = jnp.transpose(x, (1, 0, 2)).reshape(N, B * F_in).astype(jnp.bfloat16)

    out_nd = gcn_lane_dense(x_nd, wbd, att_b, bias_t, out_dtype=x.dtype)

    # (N, B*F_out) -> (B, N, F_out)
    return jnp.transpose(out_nd.reshape(N, B, F_out), (1, 0, 2))


def init_params(key, in_features, out_features, node_n):
    """Deterministic init mirroring reset_parameters (uniform(-stdv, stdv))."""
    stdv = 1.0 / math.sqrt(out_features)
    kw, ka, kb = jax.random.split(key, 3)
    weight = jax.random.uniform(kw, (in_features, out_features),
                                jnp.float32, -stdv, stdv)
    att = jax.random.uniform(ka, (node_n, node_n), jnp.float32, -stdv, stdv)
    bias = jax.random.uniform(kb, (out_features,), jnp.float32, -stdv, stdv)
    return weight, att, bias


if __name__ == "__main__":
    # B * out_features = 128 -> fully lane-dense output (unmasked vst).
    B, node_n, in_features, out_features = 4, 48, 32, 32

    key = jax.random.PRNGKey(0)
    kx, kp = jax.random.split(key)
    x = jax.random.normal(kx, (B, node_n, in_features), jnp.float32)
    weight, att, bias = init_params(kp, in_features, out_features, node_n)

    out = graph_convolution(x, weight, att, bias)
    out = jax.block_until_ready(out)

    # Reference (PyTorch semantics) in plain f32 JAX.  Kernel uses bf16 MXU
    # operands (f32 accumulation), so the tolerance is loosened accordingly.
    ref = jnp.matmul(att, jnp.matmul(x, weight)) + bias
    assert out.shape == (B, node_n, out_features)
    assert jnp.allclose(out, ref, atol=5e-2, rtol=5e-2), \
        float(jnp.max(jnp.abs(out - ref)))

    # bias=None path (PyTorch bias=False).
    out_nb = jax.block_until_ready(graph_convolution(x, weight, att, None))
    ref_nb = jnp.matmul(att, jnp.matmul(x, weight))
    assert jnp.allclose(out_nb, ref_nb, atol=5e-2, rtol=5e-2), \
        float(jnp.max(jnp.abs(out_nb - ref_nb)))

    print("KERNEL_OK")
</pallas_src>

<mosaic_0001>
module attributes {stable_mosaic.version = 11 : i64} {
  func.func @kernel(%arg0: i32, %arg1: memref<48x128xbf16, #tpu.memory_space<vmem>>, %arg2: memref<128x128xbf16, #tpu.memory_space<vmem>>, %arg3: memref<48x48xbf16, #tpu.memory_space<vmem>>, %arg4: memref<1x128xf32, #tpu.memory_space<vmem>>, %arg5: memref<48x128xf32, #tpu.memory_space<vmem>>) attributes {dimension_semantics = [#tpu.dimension_semantics<arbitrary>], iteration_bounds = array<i64: 1>, scalar_prefetch = 0 : i64, scratch_operands = 0 : i64, tpu.core_type = #tpu.core_type<tc>, window_params = [{pipeline_mode = #tpu.pipeline_mode<synchronous>, transform_indices = @transform_0, window_bounds = array<i64: 48, 128>}, {pipeline_mode = #tpu.pipeline_mode<synchronous>, transform_indices = @transform_1, window_bounds = array<i64: 128, 128>}, {pipeline_mode = #tpu.pipeline_mode<synchronous>, transform_indices = @transform_2, window_bounds = array<i64: 48, 48>}, {pipeline_mode = #tpu.pipeline_mode<synchronous>, transform_indices = @transform_3, window_bounds = array<i64: 1, 128>}, {pipeline_mode = #tpu.pipeline_mode<synchronous>, transform_indices = @transform_4, window_bounds = array<i64: 48, 128>}]} {
    %c0 = arith.constant 0 : index
    %c0_0 = arith.constant 0 : index
    %0 = vector.load %arg1[%c0, %c0_0] : memref<48x128xbf16, #tpu.memory_space<vmem>>, vector<48x128xbf16>
    %c0_1 = arith.constant 0 : index
    %c0_2 = arith.constant 0 : index
    %1 = vector.load %arg2[%c0_1, %c0_2] : memref<128x128xbf16, #tpu.memory_space<vmem>>, vector<128x128xbf16>
    %c0_3 = arith.constant 0 : index
    %c0_4 = arith.constant 0 : index
    %2 = vector.load %arg3[%c0_3, %c0_4] : memref<48x48xbf16, #tpu.memory_space<vmem>>, vector<48x48xbf16>
    %cst = arith.constant dense<0.000000e+00> : vector<48x128xf32>
    %3 = tpu.matmul %0, %1, %cst {dimension_numbers = #tpu.dot_dimension_numbers<[1], [0], [0], [1], [0, 0, 1, 1], [], []>} : vector<48x128xbf16>, vector<128x128xbf16>, vector<48x128xf32> -> vector<48x128xf32>
    %4 = arith.truncf %3 : vector<48x128xf32> to vector<48x128xbf16>
    %cst_5 = arith.constant dense<0.000000e+00> : vector<48x128xf32>
    %5 = tpu.matmul %2, %4, %cst_5 {dimension_numbers = #tpu.dot_dimension_numbers<[1], [0], [0], [1], [0, 0, 1, 1], [], []>} : vector<48x48xbf16>, vector<48x128xbf16>, vector<48x128xf32> -> vector<48x128xf32>
    %c0_6 = arith.constant 0 : index
    %c0_7 = arith.constant 0 : index
    %6 = vector.load %arg4[%c0_6, %c0_7] : memref<1x128xf32, #tpu.memory_space<vmem>>, vector<1x128xf32>
    %7 = vector.broadcast %6 : vector<1x128xf32> to vector<48x128xf32>
    %8 = arith.addf %5, %7 : vector<48x128xf32>
    %c0_8 = arith.constant 0 : index
    %c0_9 = arith.constant 0 : index
    %9 = vector.load %arg5[%c0_8, %c0_9] : memref<48x128xf32, #tpu.memory_space<vmem>>, vector<48x128xf32>
    tpu.vector_store %arg5[%c0_8, %c0_9], %8 {strides = array<i32>} : memref<48x128xf32, #tpu.memory_space<vmem>>, vector<48x128xf32>,
    return
  }
  func.func @transform_0(%arg0: i32) -> (i32, i32) {
    %c0_i32 = arith.constant 0 : i32
    %c0_i32_0 = arith.constant 0 : i32
    %c0_i32_1 = arith.constant 0 : i32
    return %c0_i32, %c0_i32_0 : i32, i32
  }
  func.func @transform_1(%arg0: i32) -> (i32, i32) {
    %c0_i32 = arith.constant 0 : i32
    %c0_i32_0 = arith.constant 0 : i32
    %c0_i32_1 = arith.constant 0 : i32
    return %c0_i32, %c0_i32_0 : i32, i32
  }
  func.func @transform_2(%arg0: i32) -> (i32, i32) {
    %c0_i32 = arith.constant 0 : i32
    %c0_i32_0 = arith.constant 0 : i32
    %c0_i32_1 = arith.constant 0 : i32
    return %c0_i32, %c0_i32_0 : i32, i32
  }
  func.func @transform_3(%arg0: i32) -> (i32, i32) {
    %c0_i32 = arith.constant 0 : i32
    %c0_i32_0 = arith.constant 0 : i32
    %c0_i32_1 = arith.constant 0 : i32
    return %c0_i32, %c0_i32_0 : i32, i32
  }
  func.func @transform_4(%arg0: i32) -> (i32, i32) {
    %c0_i32 = arith.constant 0 : i32
    %c0_i32_0 = arith.constant 0 : i32
    %c0_i32_1 = arith.constant 0 : i32
    return %c0_i32, %c0_i32_0 : i32, i32
  }
}

</mosaic_0001>

<llo_original>
// kernel: graph_convolution.1
$region0: #{graph_convolution.1}
  #allocation0 [shape = 'u32[]', space=smem, size = 0x4, offset = 0x4, fixed_abs, tag = 'smem constant byte address 0x4 - core index']
  #allocation1 [shape = 'u32[72,128]{1,0:T(1,128)}', space=vmem, size = 0x9000, scoped, tag = 'internal scratch']
  %s0 = inlined_call_operand.vmem [shape: bf16[48,128], index: 0, kind: input, shape index: {}]
  %s1 = inlined_call_operand.vmem [shape: bf16[128,128], index: 1, kind: input, shape index: {}]
  %s2 = inlined_call_operand.vmem [shape: bf16[48,48], index: 2, kind: input, shape index: {}]
  %s3 = inlined_call_operand.vmem [shape: f32[1,128], index: 3, kind: input, shape index: {}]
  %s4 = inlined_call_operand.vmem [shape: f32[48,128], index: 4, kind: output, shape index: {}]
  %s5 = sld [smem:[#allocation0]]
  $region26: #{graph_convolution.1} parent=0
    _
  %s7 = ssub.s32 1, %s5
  %s8 = scalar_select 0, %s7, %s5
  // Predicated region
  $region2: #{graph_convolution.1} parent=0 // pred_check
    _
  $region3: #{graph_convolution.1} parent=0 // pred_check_branch
    %10 = sbr.rel (0) target = $region5
  $region4: #{graph_convolution.1} parent=0 // pred_region
    _
  $region5: #{graph_convolution.1} parent=0 // pred_fallthru
    _
  // Predicated region
  $region6: #{graph_convolution.1} parent=0 // pred_check
    _
  $region7: #{graph_convolution.1} parent=0 // pred_check_branch
    %12 = sbr.rel (0) target = $region9
  $region8: #{graph_convolution.1} parent=0 // pred_region
    _
  $region9: #{graph_convolution.1} parent=0 // pred_fallthru
    _
  // Predicated region
  $region10: #{graph_convolution.1} parent=0 // pred_check
    _
  $region11: #{graph_convolution.1} parent=0 // pred_check_branch
    %14 = sbr.rel (0) target = $region13
  $region12: #{graph_convolution.1} parent=0 // pred_region
    _
  $region13: #{graph_convolution.1} parent=0 // pred_fallthru
    _
  // Predicated region
  $region14: #{graph_convolution.1} parent=0 // pred_check
    _
  $region15: #{graph_convolution.1} parent=0 // pred_check_branch
    %16 = sbr.rel (0) target = $region17
  $region16: #{graph_convolution.1} parent=0 // pred_region
    _
  $region17: #{graph_convolution.1} parent=0 // pred_fallthru
    _
  %v18 = vld [vmem:[%s0] sm:$0xf]
  %v19 = vld [vmem:[%s0 + $0x4] sm:$0xf]
  %v20 = vld [vmem:[%s0 + $0x8] sm:$0xf]
  %v21 = vld [vmem:[%s0 + $0xc] sm:$0xf]
  %v22 = vld [vmem:[%s0 + $0x10] sm:$0xf]
  %v23 = vld [vmem:[%s0 + $0x14] sm:$0xf]
  %v24 = vld [vmem:[%s1] sm:$0xf]
  %v25 = vld [vmem:[%s1 + $0x4] sm:$0xf]
  %v26 = vld [vmem:[%s1 + $0x8] sm:$0xf]
  %v27 = vld [vmem:[%s1 + $0xc] sm:$0xf]
  %v28 = vld [vmem:[%s1 + $0x10] sm:$0xf]
  %v29 = vld [vmem:[%s1 + $0x14] sm:$0xf]
  %v30 = vld [vmem:[%s1 + $0x18] sm:$0xf]
  %v31 = vld [vmem:[%s1 + $0x1c] sm:$0xf]
  %v32 = vld [vmem:[%s1 + $0x20] sm:$0xf]
  %v33 = vld [vmem:[%s1 + $0x24] sm:$0xf]
  %v34 = vld [vmem:[%s1 + $0x28] sm:$0xf]
  %v35 = vld [vmem:[%s1 + $0x2c] sm:$0xf]
  %v36 = vld [vmem:[%s1 + $0x30] sm:$0xf]
  %v37 = vld [vmem:[%s1 + $0x34] sm:$0xf]
  %v38 = vld [vmem:[%s1 + $0x38] sm:$0xf]
  %v39 = vld [vmem:[%s1 + $0x3c] sm:$0xf]
  %v40 = vld [vmem:[%s2] sm:$0xf]
  %v41 = vld [vmem:[%s2 + $0x4] sm:$0xf]
  %v42 = vld [vmem:[%s2 + $0x8] sm:$0xf]
  %v43 = vld [vmem:[%s2 + $0xc] sm:$0xf]
  %v44 = vld [vmem:[%s2 + $0x10] sm:$0xf]
  %v45 = vld [vmem:[%s2 + $0x14] sm:$0xf]
  %v52 = vunpack.c.l.b16 %v18
  %v53 = vunpack.c.l.b16 %v19
  %v54 = vunpack.c.l.b16 %v20
  %v55 = vunpack.c.l.b16 %v21
  %v56 = vunpack.c.l.b16 %v22
  %v57 = vunpack.c.l.b16 %v23
  %v58 = vpack.c.b16 %v53, %v52
  %v59 = vpack.c.b16 %v55, %v54
  %v60 = vpack.c.b16 %v57, %v56
  %v80 = vunpack.c.l.b16 %v24
  %v81 = vunpack.c.l.b16 %v25
  %v82 = vunpack.c.l.b16 %v26
  %v83 = vunpack.c.l.b16 %v27
  %v84 = vunpack.c.l.b16 %v28
  %v85 = vunpack.c.l.b16 %v29
  %v86 = vunpack.c.l.b16 %v30
  %v87 = vunpack.c.l.b16 %v31
  %v88 = vunpack.c.l.b16 %v32
  %v89 = vunpack.c.l.b16 %v33
  %v90 = vunpack.c.l.b16 %v34
  %v91 = vunpack.c.l.b16 %v35
  %v92 = vunpack.c.l.b16 %v36
  %v93 = vunpack.c.l.b16 %v37
  %v94 = vunpack.c.l.b16 %v38
  %v95 = vunpack.c.l.b16 %v39
  %v96 = vpack.c.b16 %v81, %v80
  %v97 = vpack.c.b16 %v83, %v82
  %v98 = vpack.c.b16 %v85, %v84
  %v99 = vpack.c.b16 %v87, %v86
  %v100 = vpack.c.b16 %v89, %v88
  %v101 = vpack.c.b16 %v91, %v90
  %v102 = vpack.c.b16 %v93, %v92
  %v103 = vpack.c.b16 %v95, %v94
  %112 = vmatpush.bf16.msra.mxu0 %v103
  %113 = vmatpush.bf16.msra.mxu0 %v102
  %114 = vmatpush.bf16.msra.mxu0 %v101
  %115 = vmatpush.bf16.msra.mxu0 %v100
  %116 = vmatpush.bf16.msra.mxu0 %v99
  %117 = vmatpush.bf16.msra.mxu0 %v98
  %118 = vmatpush.bf16.msra.mxu0 %v97
  %119 = vmatpush.bf16.msra.mxu0 %v96
  %120 = vmatmul.bf16.gmra.mxu0 %v58
  %v121 = vpop.f32.mrf.mxu0
  %v122 = vadd.f32 0.0, %v121
  %v123 = vpop.f32.mrf.mxu0
  %v124 = vadd.f32 0.0, %v123
  %125 = vmatmul.bf16.gmra.mxu0 %v59
  %v126 = vpop.f32.mrf.mxu0
  %v127 = vadd.f32 0.0, %v126
  %v128 = vpop.f32.mrf.mxu0
  %v129 = vadd.f32 0.0, %v128
  %130 = vmatmul.bf16.gmra.mxu0 %v60
  %v131 = vpop.f32.mrf.mxu0
  %v132 = vadd.f32 0.0, %v131
  %v133 = vpop.f32.mrf.mxu0
  %v134 = vadd.f32 0.0, %v133
  %135 = vdwg.mxu0
  %v136 = vpack.c.bf16 %v124, %v122
  %v137 = vpack.c.bf16 %v129, %v127
  %v138 = vpack.c.bf16 %v134, %v132
  %v139 = vld [vmem:[%s3] sm:$0x1]
  %v141 = vperm.slane %v139, 0
  %v149 = vunpack.c.l.b16 %v40
  %v150 = vunpack.c.l.b16 %v41
  %v151 = vunpack.c.l.b16 %v42
  %v152 = vunpack.c.l.b16 %v43
  %v153 = vunpack.c.l.b16 %v44
  %v154 = vunpack.c.l.b16 %v45
  %v155 = vpack.c.b16 %v150, %v149
  %v156 = vpack.c.b16 %v152, %v151
  %v157 = vpack.c.b16 %v154, %v153
  %vm158 = vcmask 392192
  %v160 = vsel %vm158, %v155, 0
  %v163 = vsel %vm158, %v156, 0
  %v166 = vsel %vm158, %v157, 0
  %168 = vmatpush.bf16.msra.mxu0 0
  %169 = vmatpush.bf16.msra.mxu0 0
  %170 = vmatpush.bf16.msra.mxu0 0
  %171 = vmatpush.bf16.msra.mxu0 0
  %172 = vmatpush.bf16.msra.mxu0 0
  %173 = vmatpush.bf16.msra.mxu0 %v138
  %174 = vmatpush.bf16.msra.mxu0 %v137
  %175 = vmatpush.bf16.msra.mxu0 %v136
  %176 = vmatmul.bf16.gmra.mxu0 %v160
  %v177 = vpop.f32.mrf.mxu0
  %v178 = vadd.f32 %v141, %v177
  %v179 = vpop.f32.mrf.mxu0
  %v180 = vadd.f32 %v141, %v179
  %181 = vmatmul.bf16.gmra.mxu0 %v163
  %v182 = vpop.f32.mrf.mxu0
  %v183 = vadd.f32 %v141, %v182
  %v184 = vpop.f32.mrf.mxu0
  %v185 = vadd.f32 %v141, %v184
  %186 = vmatmul.bf16.gmra.mxu0 %v166
  %v187 = vpop.f32.mrf.mxu0
  %v188 = vadd.f32 %v141, %v187
  %v189 = vpop.f32.mrf.mxu0
  %v190 = vadd.f32 %v141, %v189
  %191 = vdwg.mxu0
  %192 = vst [vmem:[%s4] sm:$0xff] %v178
  %193 = vst [vmem:[%s4 + $0x8] sm:$0xff] %v180
  %194 = vst [vmem:[%s4 + $0x10] sm:$0xff] %v183
  %195 = vst [vmem:[%s4 + $0x18] sm:$0xff] %v185
  %196 = vst [vmem:[%s4 + $0x20] sm:$0xff] %v188
  %197 = vst [vmem:[%s4 + $0x28] sm:$0xff] %v190
  // Predicated region
  $region18: #{graph_convolution.1} parent=0 // pred_check
    _
  $region19: #{graph_convolution.1} parent=0 // pred_check_branch
    %199 = sbr.rel (0) target = $region21
  $region20: #{graph_convolution.1} parent=0 // pred_region
    _
  $region21: #{graph_convolution.1} parent=0 // pred_fallthru
    _
  // Predicated region
  $region22: #{graph_convolution.1} parent=0 // pred_check
    _
  $region23: #{graph_convolution.1} parent=0 // pred_check_branch
    %201 = sbr.rel (0) target = $region25
  $region24: #{graph_convolution.1} parent=0 // pred_region
    _
  $region25: #{graph_convolution.1} parent=0 // pred_fallthru
    _

</llo_original>
